<compile_context>
chip_gen: v5e
topology: v5e:2x2
jax: 0.10.0
libtpu: 0.0.40
codegen_flags: <defaults>
</compile_context>

<pallas_src>
import math

import jax
import jax.numpy as jnp
from jax.experimental import pallas as pl
from jax.experimental.pallas import tpu as pltpu


def _round_up(n: int, m: int) -> int:
    return ((n + m - 1) // m) * m


def pwffn_kernel(x_ref, w1_ref, b1_ref, w2_ref, b2_ref, o_ref):
    # Hot path: two MXU matmuls with f32 accumulation + bias + ReLU, fully fused.
    x = x_ref[...]                                            # (tm, d_model)
    h = jnp.dot(x, w1_ref[...], preferred_element_type=jnp.float32)
    h = jnp.maximum(h + b1_ref[...], 0.0)                     # bias (f32) + ReLU
    # TODO(synk): nn.Dropout(0.3) is identity in eval mode; training-mode dropout
    # (pltpu.prng_seed + pltpu.prng_random_bits mask + 1/(1-p) rescale) omitted.
    y = jnp.dot(h.astype(w2_ref.dtype), w2_ref[...],
                preferred_element_type=jnp.float32)
    o_ref[...] = (y + b2_ref[...]).astype(o_ref.dtype)        # (tm, d_model)


# Flipped off at runtime if this JAX/Mosaic build rejects pl.Buffered(1).
_SINGLE_BUFFER_WEIGHTS = True


def pwffn(x, w1, b1, w2, b2, *, tm=256, compute_dtype=None):
    """x: (batch, seq, d_model) -> (batch, seq, d_model).

    w1: (d_model, d_ff), b1: (d_ff,), w2: (d_ff, d_model), b2: (d_model,).
    tm: row (token) tile; sweep 256/512 on v6e/v7x, 128/256 on v5e.
    compute_dtype: optional matmul input dtype (e.g. jnp.bfloat16 for native
    MXU inputs on v6e/v7x, which also halves weight/activation DMA bytes);
    accumulation is always f32 and the output keeps x.dtype.
    """
    global _SINGLE_BUFFER_WEIGHTS

    batch, seq, d_model = x.shape
    d_ff = w1.shape[1]
    out_dtype = x.dtype
    cdt = jnp.dtype(compute_dtype) if compute_dtype is not None else jnp.dtype(x.dtype)

    M = batch * seq
    # Lane-dense padding: feature dims -> multiples of 128 so output stores are
    # unmasked `vst` and every vreg lane does useful work.
    dmp = _round_up(d_model, 128)
    dfp = _round_up(d_ff, 128)
    # Row tile: default 256 rows to feed the MXU; shrink for tiny inputs; always
    # a multiple of 8 sublanes. Tokens are padded to a tile multiple (padded
    # rows sliced off afterwards), so no divisibility requirement on M.
    tm_eff = min(_round_up(tm, 8), _round_up(M, 8))
    Mp = _round_up(M, tm_eff)

    x2d = x.reshape(M, d_model).astype(cdt)
    if (Mp, dmp) != (M, d_model):
        x2d = jnp.pad(x2d, ((0, Mp - M), (0, dmp - d_model)))
    w1p = w1.astype(cdt)
    w2p = w2.astype(cdt)
    if (dmp, dfp) != (d_model, d_ff):
        w1p = jnp.pad(w1p, ((0, dmp - d_model), (0, dfp - d_ff)))
        w2p = jnp.pad(w2p, ((0, dfp - d_ff), (0, dmp - d_model)))
    # Biases stay f32: they add into the f32 accumulators and are tiny.
    b1p = jnp.pad(b1.astype(jnp.float32), (0, dfp - d_ff)).reshape(1, dfp)
    b2p = jnp.pad(b2.astype(jnp.float32), (0, dmp - d_model)).reshape(1, dmp)

    grid = (Mp // tm_eff,)

    # Advisory cost hint for XLA's scheduler around the custom call.
    cost = pl.CostEstimate(
        flops=4 * Mp * dmp * dfp,  # two matmuls, 2*M*K*N each
        transcendentals=0,
        bytes_accessed=int(x2d.size * x2d.dtype.itemsize
                           + w1p.size * w1p.dtype.itemsize
                           + w2p.size * w2p.dtype.itemsize
                           + b1p.size * 4 + b2p.size * 4
                           + Mp * dmp * jnp.dtype(out_dtype).itemsize),
    )

    def build(single_buffer_weights: bool):
        if single_buffer_weights:
            # Constant index_map => block never changes; single residency halves
            # the weights' VMEM footprint vs. default double-buffering.
            def wspec(shape):
                return pl.BlockSpec(shape, lambda i: (0, 0),
                                    pipeline_mode=pl.Buffered(1))
            wbuf = 1
        else:
            def wspec(shape):
                return pl.BlockSpec(shape, lambda i: (0, 0))
            wbuf = 2

        csz = cdt.itemsize
        osz = jnp.dtype(out_dtype).itemsize
        vmem_est = (wbuf * 2 * dmp * dfp * csz          # W1 + W2
                    + wbuf * (dfp + dmp) * 4            # biases (f32)
                    + 2 * tm_eff * dmp * csz            # x tile (double-buffered)
                    + 2 * tm_eff * dmp * osz            # out tile (double-buffered)
                    + tm_eff * dfp * 4                  # h intermediate (f32)
                    + (2 << 20))                        # compiler scratch slack
        # Explicit scoped-VMEM limit; cap at v7x's 64 MiB physical VMEM.
        vmem_limit = int(min(max(vmem_est, 16 << 20), 64 << 20))

        return pl.pallas_call(
            pwffn_kernel,
            out_shape=jax.ShapeDtypeStruct((Mp, dmp), out_dtype),
            grid_spec=pltpu.PrefetchScalarGridSpec(
                num_scalar_prefetch=0,
                grid=grid,
                in_specs=[
                    pl.BlockSpec((tm_eff, dmp), lambda i: (i, 0)),  # x tile (pipelined)
                    wspec((dmp, dfp)),                              # W1 (VMEM-resident)
                    wspec((1, dfp)),                                # b1
                    wspec((dfp, dmp)),                              # W2 (VMEM-resident)
                    wspec((1, dmp)),                                # b2
                ],
                out_specs=pl.BlockSpec((tm_eff, dmp), lambda i: (i, 0)),
            ),
            compiler_params=pltpu.CompilerParams(
                # Parallel row-tile axis shards across TensorCores (v7x megacore).
                dimension_semantics=("parallel",),
                vmem_limit_bytes=vmem_limit),
            cost_estimate=cost,
        )

    args = (x2d, w1p, b1p, w2p, b2p)
    if _SINGLE_BUFFER_WEIGHTS:
        try:
            out = build(True)(*args)
        except Exception:
            # This build rejects pl.Buffered(1); fall back to default
            # double-buffered weight blocks (identical numerics).
            _SINGLE_BUFFER_WEIGHTS = False
            out = build(False)(*args)
    else:
        out = build(False)(*args)

    return out[:M, :d_model].reshape(batch, seq, d_model)


def init_params(key, d_model, d_ff, dtype=jnp.float32):
    """torch.nn.Linear-style default init: U(-1/sqrt(fan_in), +1/sqrt(fan_in))."""
    k1, k2, k3, k4 = jax.random.split(key, 4)
    bound1 = 1.0 / math.sqrt(d_model)
    bound2 = 1.0 / math.sqrt(d_ff)
    w1 = jax.random.uniform(k1, (d_model, d_ff), dtype, -bound1, bound1)
    b1 = jax.random.uniform(k2, (d_ff,), dtype, -bound1, bound1)
    w2 = jax.random.uniform(k3, (d_ff, d_model), dtype, -bound2, bound2)
    b2 = jax.random.uniform(k4, (d_model,), dtype, -bound2, bound2)
    return w1, b1, w2, b2


def _reference(x, w1, b1, w2, b2):
    # Plain-JAX eval-mode reference (dropout == identity).
    M, d_model = x.shape[0] * x.shape[1], x.shape[-1]
    h = jnp.maximum(x.reshape(M, d_model) @ w1 + b1, 0.0)
    return (h @ w2 + b2).reshape(x.shape)


if __name__ == "__main__":
    key = jax.random.PRNGKey(0)
    kx, kp = jax.random.split(key)

    # Main check: lane-dense dims (d_model, d_ff multiples of 128), f32 compute.
    batch, seq, d_model, d_ff = 2, 64, 128, 256
    x = jax.random.normal(kx, (batch, seq, d_model), jnp.float32)
    w1, b1, w2, b2 = init_params(kp, d_model, d_ff)

    y = jax.block_until_ready(pwffn(x, w1, b1, w2, b2))
    ref = _reference(x, w1, b1, w2, b2)
    assert jnp.allclose(y, ref, atol=1e-4, rtol=1e-4), "f32 mismatch vs reference"

    # bf16 MXU inputs (native v6e/v7x dtype, halves weight DMA) with f32 accumulation.
    y_bf = jax.block_until_ready(pwffn(x, w1, b1, w2, b2, compute_dtype=jnp.bfloat16))
    assert jnp.allclose(y_bf, ref, atol=5e-2, rtol=5e-2), "bf16 mismatch vs reference"

    # Non-aligned shapes exercise the row (M % tm != 0) and lane (dim % 128 != 0)
    # padding paths.
    x2 = jax.random.normal(kx, (2, 5, 32), jnp.float32)
    p2 = init_params(kp, 32, 48)
    y2 = jax.block_until_ready(pwffn(x2, *p2))
    ref2 = _reference(x2, *p2)
    assert jnp.allclose(y2, ref2, atol=1e-4, rtol=1e-4), "padded-path mismatch vs reference"

    print("KERNEL_OK")
</pallas_src>

<mosaic_0001>
module attributes {stable_mosaic.version = 11 : i64} {
  func.func @pwffn_kernel(%arg0: i32, %arg1: memref<128x128xf32, #tpu.memory_space<vmem>>, %arg2: memref<128x256xf32, #tpu.memory_space<vmem>>, %arg3: memref<1x256xf32, #tpu.memory_space<vmem>>, %arg4: memref<256x128xf32, #tpu.memory_space<vmem>>, %arg5: memref<1x128xf32, #tpu.memory_space<vmem>>, %arg6: memref<128x128xf32, #tpu.memory_space<vmem>>) attributes {dimension_semantics = [#tpu.dimension_semantics<parallel>], iteration_bounds = array<i64: 1>, scalar_prefetch = 0 : i64, scratch_operands = 0 : i64, tpu.core_type = #tpu.core_type<tc>, window_params = [{transform_indices = @transform_0, window_bounds = array<i64: 128, 128>}, {pipeline_mode = #tpu.pipeline_mode<synchronous>, transform_indices = @transform_1, window_bounds = array<i64: 128, 256>}, {pipeline_mode = #tpu.pipeline_mode<synchronous>, transform_indices = @transform_2, window_bounds = array<i64: 1, 256>}, {pipeline_mode = #tpu.pipeline_mode<synchronous>, transform_indices = @transform_3, window_bounds = array<i64: 256, 128>}, {pipeline_mode = #tpu.pipeline_mode<synchronous>, transform_indices = @transform_4, window_bounds = array<i64: 1, 128>}, {transform_indices = @transform_5, window_bounds = array<i64: 128, 128>}]} {
    %c0 = arith.constant 0 : index
    %c0_0 = arith.constant 0 : index
    %0 = vector.load %arg1[%c0, %c0_0] : memref<128x128xf32, #tpu.memory_space<vmem>>, vector<128x128xf32>
    %c0_1 = arith.constant 0 : index
    %c0_2 = arith.constant 0 : index
    %1 = vector.load %arg2[%c0_1, %c0_2] : memref<128x256xf32, #tpu.memory_space<vmem>>, vector<128x256xf32>
    %cst = arith.constant dense<0.000000e+00> : vector<128x256xf32>
    %2 = tpu.matmul %0, %1, %cst {dimension_numbers = #tpu.dot_dimension_numbers<[1], [0], [0], [1], [0, 0, 1, 1], [], []>} : vector<128x128xf32>, vector<128x256xf32>, vector<128x256xf32> -> vector<128x256xf32>
    %c0_3 = arith.constant 0 : index
    %c0_4 = arith.constant 0 : index
    %3 = vector.load %arg3[%c0_3, %c0_4] : memref<1x256xf32, #tpu.memory_space<vmem>>, vector<1x256xf32>
    %4 = vector.broadcast %3 : vector<1x256xf32> to vector<128x256xf32>
    %5 = arith.addf %2, %4 : vector<128x256xf32>
    %cst_5 = arith.constant 0.000000e+00 : f32
    %6 = vector.broadcast %cst_5 : f32 to vector<128x256xf32>
    %7 = arith.maximumf %5, %6 : vector<128x256xf32>
    %c0_6 = arith.constant 0 : index
    %c0_7 = arith.constant 0 : index
    %8 = vector.load %arg4[%c0_6, %c0_7] : memref<256x128xf32, #tpu.memory_space<vmem>>, vector<256x128xf32>
    %cst_8 = arith.constant dense<0.000000e+00> : vector<128x128xf32>
    %9 = tpu.matmul %7, %8, %cst_8 {dimension_numbers = #tpu.dot_dimension_numbers<[1], [0], [0], [1], [0, 0, 1, 1], [], []>} : vector<128x256xf32>, vector<256x128xf32>, vector<128x128xf32> -> vector<128x128xf32>
    %c0_9 = arith.constant 0 : index
    %c0_10 = arith.constant 0 : index
    %10 = vector.load %arg5[%c0_9, %c0_10] : memref<1x128xf32, #tpu.memory_space<vmem>>, vector<1x128xf32>
    %11 = vector.broadcast %10 : vector<1x128xf32> to vector<128x128xf32>
    %12 = arith.addf %9, %11 : vector<128x128xf32>
    %c0_11 = arith.constant 0 : index
    %c0_12 = arith.constant 0 : index
    %13 = vector.load %arg6[%c0_11, %c0_12] : memref<128x128xf32, #tpu.memory_space<vmem>>, vector<128x128xf32>
    tpu.vector_store %arg6[%c0_11, %c0_12], %12 {strides = array<i32>} : memref<128x128xf32, #tpu.memory_space<vmem>>, vector<128x128xf32>,
    return
  }
  func.func @transform_0(%arg0: i32) -> (i32, i32) {
    %c0_i32 = arith.constant 0 : i32
    %c0_i32_0 = arith.constant 0 : i32
    return %arg0, %c0_i32 : i32, i32
  }
  func.func @transform_1(%arg0: i32) -> (i32, i32) {
    %c0_i32 = arith.constant 0 : i32
    %c0_i32_0 = arith.constant 0 : i32
    %c0_i32_1 = arith.constant 0 : i32
    return %c0_i32, %c0_i32_0 : i32, i32
  }
  func.func @transform_2(%arg0: i32) -> (i32, i32) {
    %c0_i32 = arith.constant 0 : i32
    %c0_i32_0 = arith.constant 0 : i32
    %c0_i32_1 = arith.constant 0 : i32
    return %c0_i32, %c0_i32_0 : i32, i32
  }
  func.func @transform_3(%arg0: i32) -> (i32, i32) {
    %c0_i32 = arith.constant 0 : i32
    %c0_i32_0 = arith.constant 0 : i32
    %c0_i32_1 = arith.constant 0 : i32
    return %c0_i32, %c0_i32_0 : i32, i32
  }
  func.func @transform_4(%arg0: i32) -> (i32, i32) {
    %c0_i32 = arith.constant 0 : i32
    %c0_i32_0 = arith.constant 0 : i32
    %c0_i32_1 = arith.constant 0 : i32
    return %c0_i32, %c0_i32_0 : i32, i32
  }
  func.func @transform_5(%arg0: i32) -> (i32, i32) {
    %c0_i32 = arith.constant 0 : i32
    %c0_i32_0 = arith.constant 0 : i32
    return %arg0, %c0_i32 : i32, i32
  }
}

module attributes {stable_mosaic.version = 11 : i64} {
  func.func @pwffn_kernel(%arg0: i32, %arg1: memref<128x128xf32, #tpu.memory_space<vmem>>, %arg2: memref<128x256xf32, #tpu.memory_space<vmem>>, %arg3: memref<1x256xf32, #tpu.memory_space<vmem>>, %arg4: memref<256x128xf32, #tpu.memory_space<vmem>>, %arg5: memref<1x128xf32, #tpu.memory_space<vmem>>, %arg6: memref<128x128xf32, #tpu.memory_space<vmem>>) attributes {dimension_semantics = [#tpu.dimension_semantics<parallel>], iteration_bounds = array<i64: 1>, scalar_prefetch = 0 : i64, scratch_operands = 0 : i64, tpu.core_type = #tpu.core_type<tc>, window_params = [{transform_indices = @transform_0, window_bounds = array<i64: 128, 128>}, {pipeline_mode = #tpu.pipeline_mode<synchronous>, transform_indices = @transform_1, window_bounds = array<i64: 128, 256>}, {pipeline_mode = #tpu.pipeline_mode<synchronous>, transform_indices = @transform_2, window_bounds = array<i64: 1, 256>}, {pipeline_mode = #tpu.pipeline_mode<synchronous>, transform_indices = @transform_3, window_bounds = array<i64: 256, 128>}, {pipeline_mode = #tpu.pipeline_mode<synchronous>, transform_indices = @transform_4, window_bounds = array<i64: 1, 128>}, {transform_indices = @transform_5, window_bounds = array<i64: 128, 128>}]} {
    %c0 = arith.constant 0 : index
    %c0_0 = arith.constant 0 : index
    %0 = vector.load %arg1[%c0, %c0_0] : memref<128x128xf32, #tpu.memory_space<vmem>>, vector<128x128xf32>
    %c0_1 = arith.constant 0 : index
    %c0_2 = arith.constant 0 : index
    %1 = vector.load %arg2[%c0_1, %c0_2] : memref<128x256xf32, #tpu.memory_space<vmem>>, vector<128x256xf32>
    %cst = arith.constant dense<0.000000e+00> : vector<128x256xf32>
    %2 = tpu.matmul %0, %1, %cst {dimension_numbers = #tpu.dot_dimension_numbers<[1], [0], [0], [1], [0, 0, 1, 1], [], []>} : vector<128x128xf32>, vector<128x256xf32>, vector<128x256xf32> -> vector<128x256xf32>
    %c0_3 = arith.constant 0 : index
    %c0_4 = arith.constant 0 : index
    %3 = vector.load %arg3[%c0_3, %c0_4] : memref<1x256xf32, #tpu.memory_space<vmem>>, vector<1x256xf32>
    %4 = vector.broadcast %3 : vector<1x256xf32> to vector<128x256xf32>
    %5 = arith.addf %2, %4 : vector<128x256xf32>
    %cst_5 = arith.constant 0.000000e+00 : f32
    %6 = vector.broadcast %cst_5 : f32 to vector<128x256xf32>
    %7 = arith.maximumf %5, %6 : vector<128x256xf32>
    %c0_6 = arith.constant 0 : index
    %c0_7 = arith.constant 0 : index
    %8 = vector.load %arg4[%c0_6, %c0_7] : memref<256x128xf32, #tpu.memory_space<vmem>>, vector<256x128xf32>
    %cst_8 = arith.constant dense<0.000000e+00> : vector<128x128xf32>
    %9 = tpu.matmul %7, %8, %cst_8 {dimension_numbers = #tpu.dot_dimension_numbers<[1], [0], [0], [1], [0, 0, 1, 1], [], []>} : vector<128x256xf32>, vector<256x128xf32>, vector<128x128xf32> -> vector<128x128xf32>
    %c0_9 = arith.constant 0 : index
    %c0_10 = arith.constant 0 : index
    %10 = vector.load %arg5[%c0_9, %c0_10] : memref<1x128xf32, #tpu.memory_space<vmem>>, vector<1x128xf32>
    %11 = vector.broadcast %10 : vector<1x128xf32> to vector<128x128xf32>
    %12 = arith.addf %9, %11 : vector<128x128xf32>
    %c0_11 = arith.constant 0 : index
    %c0_12 = arith.constant 0 : index
    %13 = vector.load %arg6[%c0_11, %c0_12] : memref<128x128xf32, #tpu.memory_space<vmem>>, vector<128x128xf32>
    tpu.vector_store %arg6[%c0_11, %c0_12], %12 {strides = array<i32>} : memref<128x128xf32, #tpu.memory_space<vmem>>, vector<128x128xf32>,
    return
  }
  func.func @transform_0(%arg0: i32) -> (i32, i32) {
    %c0_i32 = arith.constant 0 : i32
    %c0_i32_0 = arith.constant 0 : i32
    return %arg0, %c0_i32 : i32, i32
  }
  func.func @transform_1(%arg0: i32) -> (i32, i32) {
    %c0_i32 = arith.constant 0 : i32
    %c0_i32_0 = arith.constant 0 : i32
    %c0_i32_1 = arith.constant 0 : i32
    return %c0_i32, %c0_i32_0 : i32, i32
  }
  func.func @transform_2(%arg0: i32) -> (i32, i32) {
    %c0_i32 = arith.constant 0 : i32
    %c0_i32_0 = arith.constant 0 : i32
    %c0_i32_1 = arith.constant 0 : i32
    return %c0_i32, %c0_i32_0 : i32, i32
  }
  func.func @transform_3(%arg0: i32) -> (i32, i32) {
    %c0_i32 = arith.constant 0 : i32
    %c0_i32_0 = arith.constant 0 : i32
    %c0_i32_1 = arith.constant 0 : i32
    return %c0_i32, %c0_i32_0 : i32, i32
  }
  func.func @transform_4(%arg0: i32) -> (i32, i32) {
    %c0_i32 = arith.constant 0 : i32
    %c0_i32_0 = arith.constant 0 : i32
    %c0_i32_1 = arith.constant 0 : i32
    return %c0_i32, %c0_i32_0 : i32, i32
  }
  func.func @transform_5(%arg0: i32) -> (i32, i32) {
    %c0_i32 = arith.constant 0 : i32
    %c0_i32_0 = arith.constant 0 : i32
    return %arg0, %c0_i32 : i32, i32
  }
}

</mosaic_0001>

<llo_original>
// kernel: tpu_custom_call.1
$region0: #{tpu_custom_call.1}
  #allocation0 [shape = 'u32[]', space=smem, size = 0x4, offset = 0x4, fixed_abs, tag = 'smem constant byte address 0x4 - core index']
  #allocation1 [shape = 'u32[72,128]{1,0:T(1,128)}', space=vmem, size = 0x9000, scoped, tag = 'internal scratch']
  %s0 = inlined_call_operand.hbm [shape: f32[128,128], index: 0, kind: input, shape index: {}]
  %s1 = inlined_call_operand.hbm [shape: f32[128,256], index: 1, kind: input, shape index: {}]
  %s2 = inlined_call_operand.hbm [shape: f32[1,256], index: 2, kind: input, shape index: {}]
  %s3 = inlined_call_operand.hbm [shape: f32[256,128], index: 3, kind: input, shape index: {}]
  %s4 = inlined_call_operand.vmem [shape: f32[1,128], index: 4, kind: input, shape index: {}]
  %s5 = inlined_call_operand.hbm [shape: f32[128,128], index: 5, kind: output, shape index: {}]
  %s6 = sld [smem:[#allocation0]]
  $region46: #{tpu_custom_call.1} parent=0
    _
  %s8 = ssub.s32 1, %s6
  %s9 = scalar_select 0, %s8, %s6
  $region1: #{tpu_custom_call.1} parent=0
    #allocation2 [shape = 'u8[65536]{0}', space=vmem, size = 0x10000, scoped, tag = 'input window, operand 0, single buffered']
    #allocation3 [shape = 's32[1]{0}', space=sflag, size = 0x4, scoped, tag = 'scoped memory for tpu_custom_call.1']
    #allocation4 [shape = 's32[1]{0}', space=sflag, size = 0x4, scoped, tag = 'scoped memory for tpu_custom_call.1']
    #allocation5 [shape = 'u8[131072]{0}', space=vmem, size = 0x20000, scoped, tag = 'input window, operand 1, single buffered']
    #allocation6 [shape = 's32[1]{0}', space=sflag, size = 0x4, scoped, tag = 'scoped memory for tpu_custom_call.1']
    #allocation7 [shape = 'u8[1024]{0}', space=vmem, size = 0x400, scoped, tag = 'input window, operand 2, single buffered']
    #allocation8 [shape = 'u8[131072]{0}', space=vmem, size = 0x20000, scoped, tag = 'input window, operand 3, single buffered']
    #allocation9 [shape = 's32[1]{0}', space=sflag, size = 0x4, scoped, tag = 'scoped memory for tpu_custom_call.1']
    #allocation10 [shape = 'u8[65536]{0}', space=vmem, size = 0x10000, scoped, tag = 'output window, operand 0, single buffered']
    %10 = vsyncpa [#allocation3], 0
    %11 = vsyncpa [#allocation6], 0
    %12 = vsyncpa [#allocation9], 0
    %13 = vsyncpa [#allocation4], 0
    // Predicated region
    $region2: #{tpu_custom_call.1} parent=1 // pred_check
      _
    $region3: #{tpu_custom_call.1} parent=1 // pred_check_branch
      %15 = sbr.rel (0) target = $region5
    $region4: #{tpu_custom_call.1} parent=1 // pred_region
      %17 = vsyncadd [#allocation3], 0
      %s18 = sshll.u32 %s0, 4
      %s19 = int_to_ptr.hbm [resolvable:$true] %s18
      %s20 = sshll.u32 [#allocation2], 4
      %s21 = int_to_ptr.vmem [resolvable:$true] %s20
      %26 = dma.hbm_to_vmem [thread:$0]  %s19, 2048, %s21, [#allocation3], 128, 128, 8
    $region5: #{tpu_custom_call.1} parent=1 // pred_fallthru
      _
    // Predicated region
    $region6: #{tpu_custom_call.1} parent=1 // pred_check
      _
    $region7: #{tpu_custom_call.1} parent=1 // pred_check_branch
      %28 = sbr.rel (0) target = $region9
    $region8: #{tpu_custom_call.1} parent=1 // pred_region
      %30 = vsyncadd [#allocation6], 0
      %s31 = sshll.u32 %s1, 4
      %s32 = int_to_ptr.hbm [resolvable:$true] %s31
      %s33 = sshll.u32 [#allocation5], 4
      %s34 = int_to_ptr.vmem [resolvable:$true] %s33
      %39 = dma.hbm_to_vmem [thread:$0]  %s32, 4096, %s34, [#allocation6], 256, 256, 16
    $region9: #{tpu_custom_call.1} parent=1 // pred_fallthru
      _
    // Predicated region
    $region10: #{tpu_custom_call.1} parent=1 // pred_check
      _
    $region11: #{tpu_custom_call.1} parent=1 // pred_check_branch
      %41 = sbr.rel (0) target = $region13
    $region12: #{tpu_custom_call.1} parent=1 // pred_region
      %43 = vsyncadd [#allocation6], 0
      %s45 = sshll.u32 %s2, 4
      %s46 = int_to_ptr.hbm [resolvable:$true] %s45
      %s47 = sshll.u32 [#allocation7], 4
      %s48 = int_to_ptr.vmem [resolvable:$true] %s47
      %50 = dma.hbm_to_vmem [thread:$0]  %s46, 32, %s48, [#allocation6]
    $region13: #{tpu_custom_call.1} parent=1 // pred_fallthru
      _
    // Predicated region
    $region14: #{tpu_custom_call.1} parent=1 // pred_check
      _
    $region15: #{tpu_custom_call.1} parent=1 // pred_check_branch
      %52 = sbr.rel (0) target = $region17
    $region16: #{tpu_custom_call.1} parent=1 // pred_region
      %54 = vsyncadd [#allocation9], 0
      %s55 = sshll.u32 %s3, 4
      %s56 = int_to_ptr.hbm [resolvable:$true] %s55
      %s57 = sshll.u32 [#allocation8], 4
      %s58 = int_to_ptr.vmem [resolvable:$true] %s57
      %63 = dma.hbm_to_vmem [thread:$0]  %s56, 4096, %s58, [#allocation9], 128, 128, 8
    $region17: #{tpu_custom_call.1} parent=1 // pred_fallthru
      _
    // Predicated region
    $region18: #{tpu_custom_call.1} parent=1 // pred_check
      _
    $region19: #{tpu_custom_call.1} parent=1 // pred_check_branch
      %65 = sbr.rel (0) target = $region21
    $region20: #{tpu_custom_call.1} parent=1 // pred_region
      _
    $region21: #{tpu_custom_call.1} parent=1 // pred_fallthru
      _
    // Predicated region
    $region22: #{tpu_custom_call.1} parent=1 // pred_check
      _
    $region23: #{tpu_custom_call.1} parent=1 // pred_check_branch
      %67 = sbr.rel (0) target = $region25
    $region24: #{tpu_custom_call.1} parent=1 // pred_region
      %69 = dma.done [#allocation3], 2048
    $region25: #{tpu_custom_call.1} parent=1 // pred_fallthru
      _
    // Predicated region
    $region26: #{tpu_custom_call.1} parent=1 // pred_check
      _
    $region27: #{tpu_custom_call.1} parent=1 // pred_check_branch
      %71 = sbr.rel (0) target = $region29
    $region28: #{tpu_custom_call.1} parent=1 // pred_region
      %73 = dma.done [#allocation6], 4096
    $region29: #{tpu_custom_call.1} parent=1 // pred_fallthru
      _
    // Predicated region
    $region30: #{tpu_custom_call.1} parent=1 // pred_check
      _
    $region31: #{tpu_custom_call.1} parent=1 // pred_check_branch
      %75 = sbr.rel (0) target = $region33
    $region32: #{tpu_custom_call.1} parent=1 // pred_region
      %77 = dma.done [#allocation6], 32
    $region33: #{tpu_custom_call.1} parent=1 // pred_fallthru
      _
    // Predicated region
    $region34: #{tpu_custom_call.1} parent=1 // pred_check
      _
    $region35: #{tpu_custom_call.1} parent=1 // pred_check_branch
      %79 = sbr.rel (0) target = $region37
    $region36: #{tpu_custom_call.1} parent=1 // pred_region
      %81 = dma.done [#allocation9], 4096
    $region37: #{tpu_custom_call.1} parent=1 // pred_fallthru
      _
    %v82 = vld [vmem:[#allocation2] sm:$0xff]
    %v83 = vld [vmem:[#allocation2 + $0x8] sm:$0xff]
    %v84 = vld [vmem:[#allocation2 + $0x10] sm:$0xff]
    %v85 = vld [vmem:[#allocation2 + $0x18] sm:$0xff]
    %v86 = vld [vmem:[#allocation2 + $0x20] sm:$0xff]
    %v87 = vld [vmem:[#allocation2 + $0x28] sm:$0xff]
    %v88 = vld [vmem:[#allocation2 + $0x30] sm:$0xff]
    %v89 = vld [vmem:[#allocation2 + $0x38] sm:$0xff]
    %v90 = vld [vmem:[#allocation2 + $0x40] sm:$0xff]
    %v91 = vld [vmem:[#allocation2 + $0x48] sm:$0xff]
    %v92 = vld [vmem:[#allocation2 + $0x50] sm:$0xff]
    %v93 = vld [vmem:[#allocation2 + $0x58] sm:$0xff]
    %v94 = vld [vmem:[#allocation2 + $0x60] sm:$0xff]
    %v95 = vld [vmem:[#allocation2 + $0x68] sm:$0xff]
    %v96 = vld [vmem:[#allocation2 + $0x70] sm:$0xff]
    %v97 = vld [vmem:[#allocation2 + $0x78] sm:$0xff]
    %v98 = vld [vmem:[#allocation5] sm:$0xff]
    %v99 = vld [vmem:[#allocation5 + $0x8] sm:$0xff]
    %v100 = vld [vmem:[#allocation5 + $0x10] sm:$0xff]
    %v101 = vld [vmem:[#allocation5 + $0x18] sm:$0xff]
    %v102 = vld [vmem:[#allocation5 + $0x20] sm:$0xff]
    %v103 = vld [vmem:[#allocation5 + $0x28] sm:$0xff]
    %v104 = vld [vmem:[#allocation5 + $0x30] sm:$0xff]
    %v105 = vld [vmem:[#allocation5 + $0x38] sm:$0xff]
    %v106 = vld [vmem:[#allocation5 + $0x40] sm:$0xff]
    %v107 = vld [vmem:[#allocation5 + $0x48] sm:$0xff]
    %v108 = vld [vmem:[#allocation5 + $0x50] sm:$0xff]
    %v109 = vld [vmem:[#allocation5 + $0x58] sm:$0xff]
    %v110 = vld [vmem:[#allocation5 + $0x60] sm:$0xff]
    %v111 = vld [vmem:[#allocation5 + $0x68] sm:$0xff]
    %v112 = vld [vmem:[#allocation5 + $0x70] sm:$0xff]
    %v113 = vld [vmem:[#allocation5 + $0x78] sm:$0xff]
    %v114 = vld [vmem:[#allocation5 + $0x80] sm:$0xff]
    %v115 = vld [vmem:[#allocation5 + $0x88] sm:$0xff]
    %v116 = vld [vmem:[#allocation5 + $0x90] sm:$0xff]
    %v117 = vld [vmem:[#allocation5 + $0x98] sm:$0xff]
    %v118 = vld [vmem:[#allocation5 + $0xa0] sm:$0xff]
    %v119 = vld [vmem:[#allocation5 + $0xa8] sm:$0xff]
    %v120 = vld [vmem:[#allocation5 + $0xb0] sm:$0xff]
    %v121 = vld [vmem:[#allocation5 + $0xb8] sm:$0xff]
    %v122 = vld [vmem:[#allocation5 + $0xc0] sm:$0xff]
    %v123 = vld [vmem:[#allocation5 + $0xc8] sm:$0xff]
    %v124 = vld [vmem:[#allocation5 + $0xd0] sm:$0xff]
    %v125 = vld [vmem:[#allocation5 + $0xd8] sm:$0xff]
    %v126 = vld [vmem:[#allocation5 + $0xe0] sm:$0xff]
    %v127 = vld [vmem:[#allocation5 + $0xe8] sm:$0xff]
    %v128 = vld [vmem:[#allocation5 + $0xf0] sm:$0xff]
    %v129 = vld [vmem:[#allocation5 + $0xf8] sm:$0xff]
    %v130 = vld [vmem:[#allocation7] sm:$0x3]
    %v132 = vperm.slane %v130, 0
    %v133 = vperm.slane %v130, 1
    %136 = vmatpush.msra.mxu0 %v128
    %137 = vmatpush.msra.mxu0 %v126
    %138 = vmatpush.msra.mxu0 %v124
    %139 = vmatpush.msra.mxu0 %v122
    %140 = vmatpush.msra.mxu0 %v120
    %141 = vmatpush.msra.mxu0 %v118
    %142 = vmatpush.msra.mxu0 %v116
    %143 = vmatpush.msra.mxu0 %v114
    %144 = vmatpush.msra.mxu0 %v112
    %145 = vmatpush.msra.mxu0 %v110
    %146 = vmatpush.msra.mxu0 %v108
    %147 = vmatpush.msra.mxu0 %v106
    %148 = vmatpush.msra.mxu0 %v104
    %149 = vmatpush.msra.mxu0 %v102
    %150 = vmatpush.msra.mxu0 %v100
    %151 = vmatpush.msra.mxu0 %v98
    %152 = vmatmul.f32.gmra.mxu0 %v82
    %v153 = vpop.f32.mrf.mxu0
    %v154 = vadd.f32 %v132, %v153
    %155 = vmatmul.f32.gmra.mxu0 %v83
    %v156 = vpop.f32.mrf.mxu0
    %v157 = vadd.f32 %v132, %v156
    %158 = vmatmul.f32.gmra.mxu0 %v84
    %v159 = vpop.f32.mrf.mxu0
    %v160 = vadd.f32 %v132, %v159
    %161 = vmatmul.f32.gmra.mxu0 %v85
    %v162 = vpop.f32.mrf.mxu0
    %v163 = vadd.f32 %v132, %v162
    %164 = vmatmul.f32.gmra.mxu0 %v86
    %v165 = vpop.f32.mrf.mxu0
    %v166 = vadd.f32 %v132, %v165
    %167 = vmatmul.f32.gmra.mxu0 %v87
    %v168 = vpop.f32.mrf.mxu0
    %v169 = vadd.f32 %v132, %v168
    %170 = vmatmul.f32.gmra.mxu0 %v88
    %v171 = vpop.f32.mrf.mxu0
    %v172 = vadd.f32 %v132, %v171
    %173 = vmatmul.f32.gmra.mxu0 %v89
    %v174 = vpop.f32.mrf.mxu0
    %v175 = vadd.f32 %v132, %v174
    %176 = vmatmul.f32.gmra.mxu0 %v90
    %v177 = vpop.f32.mrf.mxu0
    %v178 = vadd.f32 %v132, %v177
    %179 = vmatmul.f32.gmra.mxu0 %v91
    %v180 = vpop.f32.mrf.mxu0
    %v181 = vadd.f32 %v132, %v180
    %182 = vmatmul.f32.gmra.mxu0 %v92
    %v183 = vpop.f32.mrf.mxu0
    %v184 = vadd.f32 %v132, %v183
    %185 = vmatmul.f32.gmra.mxu0 %v93
    %v186 = vpop.f32.mrf.mxu0
    %v187 = vadd.f32 %v132, %v186
    %188 = vmatmul.f32.gmra.mxu0 %v94
    %v189 = vpop.f32.mrf.mxu0
    %v190 = vadd.f32 %v132, %v189
    %191 = vmatmul.f32.gmra.mxu0 %v95
    %v192 = vpop.f32.mrf.mxu0
    %v193 = vadd.f32 %v132, %v192
    %194 = vmatmul.f32.gmra.mxu0 %v96
    %v195 = vpop.f32.mrf.mxu0
    %v196 = vadd.f32 %v132, %v195
    %197 = vmatmul.f32.gmra.mxu0 %v97
    %v198 = vpop.f32.mrf.mxu0
    %v199 = vadd.f32 %v132, %v198
    %200 = vdwg.mxu0
    %201 = vmatpush.msra.mxu0 %v129
    %202 = vmatpush.msra.mxu0 %v127
    %203 = vmatpush.msra.mxu0 %v125
    %204 = vmatpush.msra.mxu0 %v123
    %205 = vmatpush.msra.mxu0 %v121
    %206 = vmatpush.msra.mxu0 %v119
    %207 = vmatpush.msra.mxu0 %v117
    %208 = vmatpush.msra.mxu0 %v115
    %209 = vmatpush.msra.mxu0 %v113
    %210 = vmatpush.msra.mxu0 %v111
    %211 = vmatpush.msra.mxu0 %v109
    %212 = vmatpush.msra.mxu0 %v107
    %213 = vmatpush.msra.mxu0 %v105
    %214 = vmatpush.msra.mxu0 %v103
    %215 = vmatpush.msra.mxu0 %v101
    %216 = vmatpush.msra.mxu0 %v99
    %217 = vmatmul.f32.gmra.mxu0 %v82
    %v218 = vpop.f32.mrf.mxu0
    %v219 = vadd.f32 %v133, %v218
    %220 = vmatmul.f32.gmra.mxu0 %v83
    %v221 = vpop.f32.mrf.mxu0
    %v222 = vadd.f32 %v133, %v221
    %223 = vmatmul.f32.gmra.mxu0 %v84
    %v224 = vpop.f32.mrf.mxu0
    %v225 = vadd.f32 %v133, %v224
    %226 = vmatmul.f32.gmra.mxu0 %v85
    %v227 = vpop.f32.mrf.mxu0
    %v228 = vadd.f32 %v133, %v227
    %229 = vmatmul.f32.gmra.mxu0 %v86
    %v230 = vpop.f32.mrf.mxu0
    %v231 = vadd.f32 %v133, %v230
    %232 = vmatmul.f32.gmra.mxu0 %v87
    %v233 = vpop.f32.mrf.mxu0
    %v234 = vadd.f32 %v133, %v233
    %235 = vmatmul.f32.gmra.mxu0 %v88
    %v236 = vpop.f32.mrf.mxu0
    %v237 = vadd.f32 %v133, %v236
    %238 = vmatmul.f32.gmra.mxu0 %v89
    %v239 = vpop.f32.mrf.mxu0
    %v240 = vadd.f32 %v133, %v239
    %241 = vmatmul.f32.gmra.mxu0 %v90
    %v242 = vpop.f32.mrf.mxu0
    %v243 = vadd.f32 %v133, %v242
    %244 = vmatmul.f32.gmra.mxu0 %v91
    %v245 = vpop.f32.mrf.mxu0
    %v246 = vadd.f32 %v133, %v245
    %247 = vmatmul.f32.gmra.mxu0 %v92
    %v248 = vpop.f32.mrf.mxu0
    %v249 = vadd.f32 %v133, %v248
    %250 = vmatmul.f32.gmra.mxu0 %v93
    %v251 = vpop.f32.mrf.mxu0
    %v252 = vadd.f32 %v133, %v251
    %253 = vmatmul.f32.gmra.mxu0 %v94
    %v254 = vpop.f32.mrf.mxu0
    %v255 = vadd.f32 %v133, %v254
    %256 = vmatmul.f32.gmra.mxu0 %v95
    %v257 = vpop.f32.mrf.mxu0
    %v258 = vadd.f32 %v133, %v257
    %259 = vmatmul.f32.gmra.mxu0 %v96
    %v260 = vpop.f32.mrf.mxu0
    %v261 = vadd.f32 %v133, %v260
    %262 = vmatmul.f32.gmra.mxu0 %v97
    %v263 = vpop.f32.mrf.mxu0
    %v264 = vadd.f32 %v133, %v263
    %265 = vdwg.mxu0
    %v266 = vmax.f32 %v154, 0.0
    %v267 = vmax.f32 %v219, 0.0
    %v268 = vmax.f32 %v157, 0.0
    %v269 = vmax.f32 %v222, 0.0
    %v270 = vmax.f32 %v160, 0.0
    %v271 = vmax.f32 %v225, 0.0
    %v272 = vmax.f32 %v163, 0.0
    %v273 = vmax.f32 %v228, 0.0
    %v274 = vmax.f32 %v166, 0.0
    %v275 = vmax.f32 %v231, 0.0
    %v276 = vmax.f32 %v169, 0.0
    %v277 = vmax.f32 %v234, 0.0
    %v278 = vmax.f32 %v172, 0.0
    %v279 = vmax.f32 %v237, 0.0
    %v280 = vmax.f32 %v175, 0.0
    %v281 = vmax.f32 %v240, 0.0
    %v282 = vmax.f32 %v178, 0.0
    %v283 = vmax.f32 %v243, 0.0
    %v284 = vmax.f32 %v181, 0.0
    %v285 = vmax.f32 %v246, 0.0
    %v286 = vmax.f32 %v184, 0.0
    %v287 = vmax.f32 %v249, 0.0
    %v288 = vmax.f32 %v187, 0.0
    %v289 = vmax.f32 %v252, 0.0
    %v290 = vmax.f32 %v190, 0.0
    %v291 = vmax.f32 %v255, 0.0
    %v292 = vmax.f32 %v193, 0.0
    %v293 = vmax.f32 %v258, 0.0
    %v294 = vmax.f32 %v196, 0.0
    %v295 = vmax.f32 %v261, 0.0
    %v296 = vmax.f32 %v199, 0.0
    %v297 = vmax.f32 %v264, 0.0
    %v298 = vld [vmem:[#allocation8] sm:$0xff]
    %v299 = vld [vmem:[#allocation8 + $0x8] sm:$0xff]
    %v300 = vld [vmem:[#allocation8 + $0x10] sm:$0xff]
    %v301 = vld [vmem:[#allocation8 + $0x18] sm:$0xff]
    %v302 = vld [vmem:[#allocation8 + $0x20] sm:$0xff]
    %v303 = vld [vmem:[#allocation8 + $0x28] sm:$0xff]
    %v304 = vld [vmem:[#allocation8 + $0x30] sm:$0xff]
    %v305 = vld [vmem:[#allocation8 + $0x38] sm:$0xff]
    %v306 = vld [vmem:[#allocation8 + $0x40] sm:$0xff]
    %v307 = vld [vmem:[#allocation8 + $0x48] sm:$0xff]
    %v308 = vld [vmem:[#allocation8 + $0x50] sm:$0xff]
    %v309 = vld [vmem:[#allocation8 + $0x58] sm:$0xff]
    %v310 = vld [vmem:[#allocation8 + $0x60] sm:$0xff]
    %v311 = vld [vmem:[#allocation8 + $0x68] sm:$0xff]
    %v312 = vld [vmem:[#allocation8 + $0x70] sm:$0xff]
    %v313 = vld [vmem:[#allocation8 + $0x78] sm:$0xff]
    %v314 = vld [vmem:[#allocation8 + $0x80] sm:$0xff]
    %v315 = vld [vmem:[#allocation8 + $0x88] sm:$0xff]
    %v316 = vld [vmem:[#allocation8 + $0x90] sm:$0xff]
    %v317 = vld [vmem:[#allocation8 + $0x98] sm:$0xff]
    %v318 = vld [vmem:[#allocation8 + $0xa0] sm:$0xff]
    %v319 = vld [vmem:[#allocation8 + $0xa8] sm:$0xff]
    %v320 = vld [vmem:[#allocation8 + $0xb0] sm:$0xff]
    %v321 = vld [vmem:[#allocation8 + $0xb8] sm:$0xff]
    %v322 = vld [vmem:[#allocation8 + $0xc0] sm:$0xff]
    %v323 = vld [vmem:[#allocation8 + $0xc8] sm:$0xff]
    %v324 = vld [vmem:[#allocation8 + $0xd0] sm:$0xff]
    %v325 = vld [vmem:[#allocation8 + $0xd8] sm:$0xff]
    %v326 = vld [vmem:[#allocation8 + $0xe0] sm:$0xff]
    %v327 = vld [vmem:[#allocation8 + $0xe8] sm:$0xff]
    %v328 = vld [vmem:[#allocation8 + $0xf0] sm:$0xff]
    %v329 = vld [vmem:[#allocation8 + $0xf8] sm:$0xff]
    %v330 = vld [vmem:[%s4] sm:$0x1]
    %v332 = vperm.slane %v330, 0
    %334 = vmatpush.msra.mxu0 %v313
    %335 = vmatpush.msra.mxu0 %v312
    %336 = vmatpush.msra.mxu0 %v311
    %337 = vmatpush.msra.mxu0 %v310
    %338 = vmatpush.msra.mxu0 %v309
    %339 = vmatpush.msra.mxu0 %v308
    %340 = vmatpush.msra.mxu0 %v307
    %341 = vmatpush.msra.mxu0 %v306
    %342 = vmatpush.msra.mxu0 %v305
    %343 = vmatpush.msra.mxu0 %v304
    %344 = vmatpush.msra.mxu0 %v303
    %345 = vmatpush.msra.mxu0 %v302
    %346 = vmatpush.msra.mxu0 %v301
    %347 = vmatpush.msra.mxu0 %v300
    %348 = vmatpush.msra.mxu0 %v299
    %349 = vmatpush.msra.mxu0 %v298
    %350 = vmatmul.f32.gmra.mxu0 %v266
    %v351 = vpop.f32.mrf.mxu0
    %v352 = vadd.f32 %v332, %v351
    %353 = vmatmul.f32.gmra.mxu0 %v268
    %v354 = vpop.f32.mrf.mxu0
    %v355 = vadd.f32 %v332, %v354
    %356 = vmatmul.f32.gmra.mxu0 %v270
    %v357 = vpop.f32.mrf.mxu0
    %v358 = vadd.f32 %v332, %v357
    %359 = vmatmul.f32.gmra.mxu0 %v272
    %v360 = vpop.f32.mrf.mxu0
    %v361 = vadd.f32 %v332, %v360
    %362 = vmatmul.f32.gmra.mxu0 %v274
    %v363 = vpop.f32.mrf.mxu0
    %v364 = vadd.f32 %v332, %v363
    %365 = vmatmul.f32.gmra.mxu0 %v276
    %v366 = vpop.f32.mrf.mxu0
    %v367 = vadd.f32 %v332, %v366
    %368 = vmatmul.f32.gmra.mxu0 %v278
    %v369 = vpop.f32.mrf.mxu0
    %v370 = vadd.f32 %v332, %v369
    %371 = vmatmul.f32.gmra.mxu0 %v280
    %v372 = vpop.f32.mrf.mxu0
    %v373 = vadd.f32 %v332, %v372
    %374 = vmatmul.f32.gmra.mxu0 %v282
    %v375 = vpop.f32.mrf.mxu0
    %v376 = vadd.f32 %v332, %v375
    %377 = vmatmul.f32.gmra.mxu0 %v284
    %v378 = vpop.f32.mrf.mxu0
    %v379 = vadd.f32 %v332, %v378
    %380 = vmatmul.f32.gmra.mxu0 %v286
    %v381 = vpop.f32.mrf.mxu0
    %v382 = vadd.f32 %v332, %v381
    %383 = vmatmul.f32.gmra.mxu0 %v288
    %v384 = vpop.f32.mrf.mxu0
    %v385 = vadd.f32 %v332, %v384
    %386 = vmatmul.f32.gmra.mxu0 %v290
    %v387 = vpop.f32.mrf.mxu0
    %v388 = vadd.f32 %v332, %v387
    %389 = vmatmul.f32.gmra.mxu0 %v292
    %v390 = vpop.f32.mrf.mxu0
    %v391 = vadd.f32 %v332, %v390
    %392 = vmatmul.f32.gmra.mxu0 %v294
    %v393 = vpop.f32.mrf.mxu0
    %v394 = vadd.f32 %v332, %v393
    %395 = vmatmul.f32.gmra.mxu0 %v296
    %v396 = vpop.f32.mrf.mxu0
    %v397 = vadd.f32 %v332, %v396
    %398 = vdwg.mxu0
    %399 = vmatpush.msra.mxu0 %v329
    %400 = vmatpush.msra.mxu0 %v328
    %401 = vmatpush.msra.mxu0 %v327
    %402 = vmatpush.msra.mxu0 %v326
    %403 = vmatpush.msra.mxu0 %v325
    %404 = vmatpush.msra.mxu0 %v324
    %405 = vmatpush.msra.mxu0 %v323
    %406 = vmatpush.msra.mxu0 %v322
    %407 = vmatpush.msra.mxu0 %v321
    %408 = vmatpush.msra.mxu0 %v320
    %409 = vmatpush.msra.mxu0 %v319
    %410 = vmatpush.msra.mxu0 %v318
    %411 = vmatpush.msra.mxu0 %v317
    %412 = vmatpush.msra.mxu0 %v316
    %413 = vmatpush.msra.mxu0 %v315
    %414 = vmatpush.msra.mxu0 %v314
    %415 = vmatmul.f32.gmra.mxu0 %v267
    %v416 = vpop.f32.mrf.mxu0
    %v417 = vadd.f32 %v352, %v416
    %418 = vmatmul.f32.gmra.mxu0 %v269
    %v419 = vpop.f32.mrf.mxu0
    %v420 = vadd.f32 %v355, %v419
    %421 = vmatmul.f32.gmra.mxu0 %v271
    %v422 = vpop.f32.mrf.mxu0
    %v423 = vadd.f32 %v358, %v422
    %424 = vmatmul.f32.gmra.mxu0 %v273
    %v425 = vpop.f32.mrf.mxu0
    %v426 = vadd.f32 %v361, %v425
    %427 = vmatmul.f32.gmra.mxu0 %v275
    %v428 = vpop.f32.mrf.mxu0
    %v429 = vadd.f32 %v364, %v428
    %430 = vmatmul.f32.gmra.mxu0 %v277
    %v431 = vpop.f32.mrf.mxu0
    %v432 = vadd.f32 %v367, %v431
    %433 = vmatmul.f32.gmra.mxu0 %v279
    %v434 = vpop.f32.mrf.mxu0
    %v435 = vadd.f32 %v370, %v434
    %436 = vmatmul.f32.gmra.mxu0 %v281
    %v437 = vpop.f32.mrf.mxu0
    %v438 = vadd.f32 %v373, %v437
    %439 = vmatmul.f32.gmra.mxu0 %v283
    %v440 = vpop.f32.mrf.mxu0
    %v441 = vadd.f32 %v376, %v440
    %442 = vmatmul.f32.gmra.mxu0 %v285
    %v443 = vpop.f32.mrf.mxu0
    %v444 = vadd.f32 %v379, %v443
    %445 = vmatmul.f32.gmra.mxu0 %v287
    %v446 = vpop.f32.mrf.mxu0
    %v447 = vadd.f32 %v382, %v446
    %448 = vmatmul.f32.gmra.mxu0 %v289
    %v449 = vpop.f32.mrf.mxu0
    %v450 = vadd.f32 %v385, %v449
    %451 = vmatmul.f32.gmra.mxu0 %v291
    %v452 = vpop.f32.mrf.mxu0
    %v453 = vadd.f32 %v388, %v452
    %454 = vmatmul.f32.gmra.mxu0 %v293
    %v455 = vpop.f32.mrf.mxu0
    %v456 = vadd.f32 %v391, %v455
    %457 = vmatmul.f32.gmra.mxu0 %v295
    %v458 = vpop.f32.mrf.mxu0
    %v459 = vadd.f32 %v394, %v458
    %460 = vmatmul.f32.gmra.mxu0 %v297
    %v461 = vpop.f32.mrf.mxu0
    %v462 = vadd.f32 %v397, %v461
    %463 = vdwg.mxu0
    %464 = vst [vmem:[#allocation10] sm:$0xff] %v417
    %465 = vst [vmem:[#allocation10 + $0x8] sm:$0xff] %v420
    %466 = vst [vmem:[#allocation10 + $0x10] sm:$0xff] %v423
    %467 = vst [vmem:[#allocation10 + $0x18] sm:$0xff] %v426
    %468 = vst [vmem:[#allocation10 + $0x20] sm:$0xff] %v429
    %469 = vst [vmem:[#allocation10 + $0x28] sm:$0xff] %v432
    %470 = vst [vmem:[#allocation10 + $0x30] sm:$0xff] %v435
    %471 = vst [vmem:[#allocation10 + $0x38] sm:$0xff] %v438
    %472 = vst [vmem:[#allocation10 + $0x40] sm:$0xff] %v441
    %473 = vst [vmem:[#allocation10 + $0x48] sm:$0xff] %v444
    %474 = vst [vmem:[#allocation10 + $0x50] sm:$0xff] %v447
    %475 = vst [vmem:[#allocation10 + $0x58] sm:$0xff] %v450
    %476 = vst [vmem:[#allocation10 + $0x60] sm:$0xff] %v453
    %477 = vst [vmem:[#allocation10 + $0x68] sm:$0xff] %v456
    %478 = vst [vmem:[#allocation10 + $0x70] sm:$0xff] %v459
    %479 = vst [vmem:[#allocation10 + $0x78] sm:$0xff] %v462
    // Predicated region
    $region38: #{tpu_custom_call.1} parent=1 // pred_check
      _
    $region39: #{tpu_custom_call.1} parent=1 // pred_check_branch
      %481 = sbr.rel (0) target = $region41
    $region40: #{tpu_custom_call.1} parent=1 // pred_region
      %483 = vsyncadd [#allocation4], 0
      %s484 = sshll.u32 [#allocation10], 4
      %s485 = int_to_ptr.vmem [resolvable:$true] %s484
      %s486 = sshll.u32 %s5, 4
      %s487 = int_to_ptr.hbm [resolvable:$true] %s486
      %492 = dma.vmem_to_hbm [thread:$0]  %s485, 2048, %s487, [#allocation4], 128, 128, 8
    $region41: #{tpu_custom_call.1} parent=1 // pred_fallthru
      _
    // Predicated region
    $region42: #{tpu_custom_call.1} parent=1 // pred_check
      _
    $region43: #{tpu_custom_call.1} parent=1 // pred_check_branch
      %494 = sbr.rel (0) target = $region45
    $region44: #{tpu_custom_call.1} parent=1 // pred_region
      %496 = dma.done [#allocation4], 2048
    $region45: #{tpu_custom_call.1} parent=1 // pred_fallthru
      _
    %497 = vsyncpa [#allocation3], 1
    %498 = vsyncpa [#allocation6], 1
    %499 = vsyncpa [#allocation9], 1
    %500 = vsyncpa [#allocation4], 1

// kernel: tpu_custom_call.1
$region0: #{tpu_custom_call.1}
  #allocation0 [shape = 'u32[]', space=smem, size = 0x4, offset = 0x4, fixed_abs, tag = 'smem constant byte address 0x4 - core index']
  #allocation1 [shape = 'u32[72,128]{1,0:T(1,128)}', space=vmem, size = 0x9000, scoped, tag = 'internal scratch']
  %s0 = inlined_call_operand.hbm [shape: f32[128,128], index: 0, kind: input, shape index: {}]
  %s1 = inlined_call_operand.hbm [shape: f32[128,256], index: 1, kind: input, shape index: {}]
  %s2 = inlined_call_operand.hbm [shape: f32[1,256], index: 2, kind: input, shape index: {}]
  %s3 = inlined_call_operand.hbm [shape: f32[256,128], index: 3, kind: input, shape index: {}]
  %s4 = inlined_call_operand.vmem [shape: f32[1,128], index: 4, kind: input, shape index: {}]
  %s5 = inlined_call_operand.hbm [shape: f32[128,128], index: 5, kind: output, shape index: {}]
  %s6 = sld [smem:[#allocation0]]
  $region46: #{tpu_custom_call.1} parent=0
    _
  %s8 = ssub.s32 1, %s6
  %s9 = scalar_select 0, %s8, %s6
  $region1: #{tpu_custom_call.1} parent=0
    #allocation2 [shape = 'u8[65536]{0}', space=vmem, size = 0x10000, scoped, tag = 'input window, operand 0, single buffered']
    #allocation3 [shape = 's32[1]{0}', space=sflag, size = 0x4, scoped, tag = 'scoped memory for tpu_custom_call.1']
    #allocation4 [shape = 's32[1]{0}', space=sflag, size = 0x4, scoped, tag = 'scoped memory for tpu_custom_call.1']
    #allocation5 [shape = 'u8[131072]{0}', space=vmem, size = 0x20000, scoped, tag = 'input window, operand 1, single buffered']
    #allocation6 [shape = 's32[1]{0}', space=sflag, size = 0x4, scoped, tag = 'scoped memory for tpu_custom_call.1']
    #allocation7 [shape = 'u8[1024]{0}', space=vmem, size = 0x400, scoped, tag = 'input window, operand 2, single buffered']
    #allocation8 [shape = 'u8[131072]{0}', space=vmem, size = 0x20000, scoped, tag = 'input window, operand 3, single buffered']
    #allocation9 [shape = 's32[1]{0}', space=sflag, size = 0x4, scoped, tag = 'scoped memory for tpu_custom_call.1']
    #allocation10 [shape = 'u8[65536]{0}', space=vmem, size = 0x10000, scoped, tag = 'output window, operand 0, single buffered']
    %10 = vsyncpa [#allocation3], 0
    %11 = vsyncpa [#allocation6], 0
    %12 = vsyncpa [#allocation9], 0
    %13 = vsyncpa [#allocation4], 0
    // Predicated region
    $region2: #{tpu_custom_call.1} parent=1 // pred_check
      _
    $region3: #{tpu_custom_call.1} parent=1 // pred_check_branch
      %15 = sbr.rel (0) target = $region5
    $region4: #{tpu_custom_call.1} parent=1 // pred_region
      %17 = vsyncadd [#allocation3], 0
      %s18 = sshll.u32 %s0, 4
      %s19 = int_to_ptr.hbm [resolvable:$true] %s18
      %s20 = sshll.u32 [#allocation2], 4
      %s21 = int_to_ptr.vmem [resolvable:$true] %s20
      %26 = dma.hbm_to_vmem [thread:$0]  %s19, 2048, %s21, [#allocation3], 128, 128, 8
    $region5: #{tpu_custom_call.1} parent=1 // pred_fallthru
      _
    // Predicated region
    $region6: #{tpu_custom_call.1} parent=1 // pred_check
      _
    $region7: #{tpu_custom_call.1} parent=1 // pred_check_branch
      %28 = sbr.rel (0) target = $region9
    $region8: #{tpu_custom_call.1} parent=1 // pred_region
      %30 = vsyncadd [#allocation6], 0
      %s31 = sshll.u32 %s1, 4
      %s32 = int_to_ptr.hbm [resolvable:$true] %s31
      %s33 = sshll.u32 [#allocation5], 4
      %s34 = int_to_ptr.vmem [resolvable:$true] %s33
      %39 = dma.hbm_to_vmem [thread:$0]  %s32, 4096, %s34, [#allocation6], 256, 256, 16
    $region9: #{tpu_custom_call.1} parent=1 // pred_fallthru
      _
    // Predicated region
    $region10: #{tpu_custom_call.1} parent=1 // pred_check
      _
    $region11: #{tpu_custom_call.1} parent=1 // pred_check_branch
      %41 = sbr.rel (0) target = $region13
    $region12: #{tpu_custom_call.1} parent=1 // pred_region
      %43 = vsyncadd [#allocation6], 0
      %s45 = sshll.u32 %s2, 4
      %s46 = int_to_ptr.hbm [resolvable:$true] %s45
      %s47 = sshll.u32 [#allocation7], 4
      %s48 = int_to_ptr.vmem [resolvable:$true] %s47
      %50 = dma.hbm_to_vmem [thread:$0]  %s46, 32, %s48, [#allocation6]
    $region13: #{tpu_custom_call.1} parent=1 // pred_fallthru
      _
    // Predicated region
    $region14: #{tpu_custom_call.1} parent=1 // pred_check
      _
    $region15: #{tpu_custom_call.1} parent=1 // pred_check_branch
      %52 = sbr.rel (0) target = $region17
    $region16: #{tpu_custom_call.1} parent=1 // pred_region
      %54 = vsyncadd [#allocation9], 0
      %s55 = sshll.u32 %s3, 4
      %s56 = int_to_ptr.hbm [resolvable:$true] %s55
      %s57 = sshll.u32 [#allocation8], 4
      %s58 = int_to_ptr.vmem [resolvable:$true] %s57
      %63 = dma.hbm_to_vmem [thread:$0]  %s56, 4096, %s58, [#allocation9], 128, 128, 8
    $region17: #{tpu_custom_call.1} parent=1 // pred_fallthru
      _
    // Predicated region
    $region18: #{tpu_custom_call.1} parent=1 // pred_check
      _
    $region19: #{tpu_custom_call.1} parent=1 // pred_check_branch
      %65 = sbr.rel (0) target = $region21
    $region20: #{tpu_custom_call.1} parent=1 // pred_region
      _
    $region21: #{tpu_custom_call.1} parent=1 // pred_fallthru
      _
    // Predicated region
    $region22: #{tpu_custom_call.1} parent=1 // pred_check
      _
    $region23: #{tpu_custom_call.1} parent=1 // pred_check_branch
      %67 = sbr.rel (0) target = $region25
    $region24: #{tpu_custom_call.1} parent=1 // pred_region
      %69 = dma.done [#allocation3], 2048
    $region25: #{tpu_custom_call.1} parent=1 // pred_fallthru
      _
    // Predicated region
    $region26: #{tpu_custom_call.1} parent=1 // pred_check
      _
    $region27: #{tpu_custom_call.1} parent=1 // pred_check_branch
      %71 = sbr.rel (0) target = $region29
    $region28: #{tpu_custom_call.1} parent=1 // pred_region
      %73 = dma.done [#allocation6], 4096
    $region29: #{tpu_custom_call.1} parent=1 // pred_fallthru
      _
    // Predicated region
    $region30: #{tpu_custom_call.1} parent=1 // pred_check
      _
    $region31: #{tpu_custom_call.1} parent=1 // pred_check_branch
      %75 = sbr.rel (0) target = $region33
    $region32: #{tpu_custom_call.1} parent=1 // pred_region
      %77 = dma.done [#allocation6], 32
    $region33: #{tpu_custom_call.1} parent=1 // pred_fallthru
      _
    // Predicated region
    $region34: #{tpu_custom_call.1} parent=1 // pred_check
      _
    $region35: #{tpu_custom_call.1} parent=1 // pred_check_branch
      %79 = sbr.rel (0) target = $region37
    $region36: #{tpu_custom_call.1} parent=1 // pred_region
      %81 = dma.done [#allocation9], 4096
    $region37: #{tpu_custom_call.1} parent=1 // pred_fallthru
      _
    %v82 = vld [vmem:[#allocation2] sm:$0xff]
    %v83 = vld [vmem:[#allocation2 + $0x8] sm:$0xff]
    %v84 = vld [vmem:[#allocation2 + $0x10] sm:$0xff]
    %v85 = vld [vmem:[#allocation2 + $0x18] sm:$0xff]
    %v86 = vld [vmem:[#allocation2 + $0x20] sm:$0xff]
    %v87 = vld [vmem:[#allocation2 + $0x28] sm:$0xff]
    %v88 = vld [vmem:[#allocation2 + $0x30] sm:$0xff]
    %v89 = vld [vmem:[#allocation2 + $0x38] sm:$0xff]
    %v90 = vld [vmem:[#allocation2 + $0x40] sm:$0xff]
    %v91 = vld [vmem:[#allocation2 + $0x48] sm:$0xff]
    %v92 = vld [vmem:[#allocation2 + $0x50] sm:$0xff]
    %v93 = vld [vmem:[#allocation2 + $0x58] sm:$0xff]
    %v94 = vld [vmem:[#allocation2 + $0x60] sm:$0xff]
    %v95 = vld [vmem:[#allocation2 + $0x68] sm:$0xff]
    %v96 = vld [vmem:[#allocation2 + $0x70] sm:$0xff]
    %v97 = vld [vmem:[#allocation2 + $0x78] sm:$0xff]
    %v98 = vld [vmem:[#allocation5] sm:$0xff]
    %v99 = vld [vmem:[#allocation5 + $0x8] sm:$0xff]
    %v100 = vld [vmem:[#allocation5 + $0x10] sm:$0xff]
    %v101 = vld [vmem:[#allocation5 + $0x18] sm:$0xff]
    %v102 = vld [vmem:[#allocation5 + $0x20] sm:$0xff]
    %v103 = vld [vmem:[#allocation5 + $0x28] sm:$0xff]
    %v104 = vld [vmem:[#allocation5 + $0x30] sm:$0xff]
    %v105 = vld [vmem:[#allocation5 + $0x38] sm:$0xff]
    %v106 = vld [vmem:[#allocation5 + $0x40] sm:$0xff]
    %v107 = vld [vmem:[#allocation5 + $0x48] sm:$0xff]
    %v108 = vld [vmem:[#allocation5 + $0x50] sm:$0xff]
    %v109 = vld [vmem:[#allocation5 + $0x58] sm:$0xff]
    %v110 = vld [vmem:[#allocation5 + $0x60] sm:$0xff]
    %v111 = vld [vmem:[#allocation5 + $0x68] sm:$0xff]
    %v112 = vld [vmem:[#allocation5 + $0x70] sm:$0xff]
    %v113 = vld [vmem:[#allocation5 + $0x78] sm:$0xff]
    %v114 = vld [vmem:[#allocation5 + $0x80] sm:$0xff]
    %v115 = vld [vmem:[#allocation5 + $0x88] sm:$0xff]
    %v116 = vld [vmem:[#allocation5 + $0x90] sm:$0xff]
    %v117 = vld [vmem:[#allocation5 + $0x98] sm:$0xff]
    %v118 = vld [vmem:[#allocation5 + $0xa0] sm:$0xff]
    %v119 = vld [vmem:[#allocation5 + $0xa8] sm:$0xff]
    %v120 = vld [vmem:[#allocation5 + $0xb0] sm:$0xff]
    %v121 = vld [vmem:[#allocation5 + $0xb8] sm:$0xff]
    %v122 = vld [vmem:[#allocation5 + $0xc0] sm:$0xff]
    %v123 = vld [vmem:[#allocation5 + $0xc8] sm:$0xff]
    %v124 = vld [vmem:[#allocation5 + $0xd0] sm:$0xff]
    %v125 = vld [vmem:[#allocation5 + $0xd8] sm:$0xff]
    %v126 = vld [vmem:[#allocation5 + $0xe0] sm:$0xff]
    %v127 = vld [vmem:[#allocation5 + $0xe8] sm:$0xff]
    %v128 = vld [vmem:[#allocation5 + $0xf0] sm:$0xff]
    %v129 = vld [vmem:[#allocation5 + $0xf8] sm:$0xff]
    %v130 = vld [vmem:[#allocation7] sm:$0x3]
    %v132 = vperm.slane %v130, 0
    %v133 = vperm.slane %v130, 1
    %136 = vmatpush.msra.mxu0 %v128
    %137 = vmatpush.msra.mxu0 %v126
    %138 = vmatpush.msra.mxu0 %v124
    %139 = vmatpush.msra.mxu0 %v122
    %140 = vmatpush.msra.mxu0 %v120
    %141 = vmatpush.msra.mxu0 %v118
    %142 = vmatpush.msra.mxu0 %v116
    %143 = vmatpush.msra.mxu0 %v114
    %144 = vmatpush.msra.mxu0 %v112
    %145 = vmatpush.msra.mxu0 %v110
    %146 = vmatpush.msra.mxu0 %v108
    %147 = vmatpush.msra.mxu0 %v106
    %148 = vmatpush.msra.mxu0 %v104
    %149 = vmatpush.msra.mxu0 %v102
    %150 = vmatpush.msra.mxu0 %v100
    %151 = vmatpush.msra.mxu0 %v98
    %152 = vmatmul.f32.gmra.mxu0 %v82
    %v153 = vpop.f32.mrf.mxu0
    %v154 = vadd.f32 %v132, %v153
    %155 = vmatmul.f32.gmra.mxu0 %v83
    %v156 = vpop.f32.mrf.mxu0
    %v157 = vadd.f32 %v132, %v156
    %158 = vmatmul.f32.gmra.mxu0 %v84
    %v159 = vpop.f32.mrf.mxu0
    %v160 = vadd.f32 %v132, %v159
    %161 = vmatmul.f32.gmra.mxu0 %v85
    %v162 = vpop.f32.mrf.mxu0
    %v163 = vadd.f32 %v132, %v162
    %164 = vmatmul.f32.gmra.mxu0 %v86
    %v165 = vpop.f32.mrf.mxu0
    %v166 = vadd.f32 %v132, %v165
    %167 = vmatmul.f32.gmra.mxu0 %v87
    %v168 = vpop.f32.mrf.mxu0
    %v169 = vadd.f32 %v132, %v168
    %170 = vmatmul.f32.gmra.mxu0 %v88
    %v171 = vpop.f32.mrf.mxu0
    %v172 = vadd.f32 %v132, %v171
    %173 = vmatmul.f32.gmra.mxu0 %v89
    %v174 = vpop.f32.mrf.mxu0
    %v175 = vadd.f32 %v132, %v174
    %176 = vmatmul.f32.gmra.mxu0 %v90
    %v177 = vpop.f32.mrf.mxu0
    %v178 = vadd.f32 %v132, %v177
    %179 = vmatmul.f32.gmra.mxu0 %v91
    %v180 = vpop.f32.mrf.mxu0
    %v181 = vadd.f32 %v132, %v180
    %182 = vmatmul.f32.gmra.mxu0 %v92
    %v183 = vpop.f32.mrf.mxu0
    %v184 = vadd.f32 %v132, %v183
    %185 = vmatmul.f32.gmra.mxu0 %v93
    %v186 = vpop.f32.mrf.mxu0
    %v187 = vadd.f32 %v132, %v186
    %188 = vmatmul.f32.gmra.mxu0 %v94
    %v189 = vpop.f32.mrf.mxu0
    %v190 = vadd.f32 %v132, %v189
    %191 = vmatmul.f32.gmra.mxu0 %v95
    %v192 = vpop.f32.mrf.mxu0
    %v193 = vadd.f32 %v132, %v192
    %194 = vmatmul.f32.gmra.mxu0 %v96
    %v195 = vpop.f32.mrf.mxu0
    %v196 = vadd.f32 %v132, %v195
    %197 = vmatmul.f32.gmra.mxu0 %v97
    %v198 = vpop.f32.mrf.mxu0
    %v199 = vadd.f32 %v132, %v198
    %200 = vdwg.mxu0
    %201 = vmatpush.msra.mxu0 %v129
    %202 = vmatpush.msra.mxu0 %v127
    %203 = vmatpush.msra.mxu0 %v125
    %204 = vmatpush.msra.mxu0 %v123
    %205 = vmatpush.msra.mxu0 %v121
    %206 = vmatpush.msra.mxu0 %v119
    %207 = vmatpush.msra.mxu0 %v117
    %208 = vmatpush.msra.mxu0 %v115
    %209 = vmatpush.msra.mxu0 %v113
    %210 = vmatpush.msra.mxu0 %v111
    %211 = vmatpush.msra.mxu0 %v109
    %212 = vmatpush.msra.mxu0 %v107
    %213 = vmatpush.msra.mxu0 %v105
    %214 = vmatpush.msra.mxu0 %v103
    %215 = vmatpush.msra.mxu0 %v101
    %216 = vmatpush.msra.mxu0 %v99
    %217 = vmatmul.f32.gmra.mxu0 %v82
    %v218 = vpop.f32.mrf.mxu0
    %v219 = vadd.f32 %v133, %v218
    %220 = vmatmul.f32.gmra.mxu0 %v83
    %v221 = vpop.f32.mrf.mxu0
    %v222 = vadd.f32 %v133, %v221
    %223 = vmatmul.f32.gmra.mxu0 %v84
    %v224 = vpop.f32.mrf.mxu0
    %v225 = vadd.f32 %v133, %v224
    %226 = vmatmul.f32.gmra.mxu0 %v85
    %v227 = vpop.f32.mrf.mxu0
    %v228 = vadd.f32 %v133, %v227
    %229 = vmatmul.f32.gmra.mxu0 %v86
    %v230 = vpop.f32.mrf.mxu0
    %v231 = vadd.f32 %v133, %v230
    %232 = vmatmul.f32.gmra.mxu0 %v87
    %v233 = vpop.f32.mrf.mxu0
    %v234 = vadd.f32 %v133, %v233
    %235 = vmatmul.f32.gmra.mxu0 %v88
    %v236 = vpop.f32.mrf.mxu0
    %v237 = vadd.f32 %v133, %v236
    %238 = vmatmul.f32.gmra.mxu0 %v89
    %v239 = vpop.f32.mrf.mxu0
    %v240 = vadd.f32 %v133, %v239
    %241 = vmatmul.f32.gmra.mxu0 %v90
    %v242 = vpop.f32.mrf.mxu0
    %v243 = vadd.f32 %v133, %v242
    %244 = vmatmul.f32.gmra.mxu0 %v91
    %v245 = vpop.f32.mrf.mxu0
    %v246 = vadd.f32 %v133, %v245
    %247 = vmatmul.f32.gmra.mxu0 %v92
    %v248 = vpop.f32.mrf.mxu0
    %v249 = vadd.f32 %v133, %v248
    %250 = vmatmul.f32.gmra.mxu0 %v93
    %v251 = vpop.f32.mrf.mxu0
    %v252 = vadd.f32 %v133, %v251
    %253 = vmatmul.f32.gmra.mxu0 %v94
    %v254 = vpop.f32.mrf.mxu0
    %v255 = vadd.f32 %v133, %v254
    %256 = vmatmul.f32.gmra.mxu0 %v95
    %v257 = vpop.f32.mrf.mxu0
    %v258 = vadd.f32 %v133, %v257
    %259 = vmatmul.f32.gmra.mxu0 %v96
    %v260 = vpop.f32.mrf.mxu0
    %v261 = vadd.f32 %v133, %v260
    %262 = vmatmul.f32.gmra.mxu0 %v97
    %v263 = vpop.f32.mrf.mxu0
    %v264 = vadd.f32 %v133, %v263
    %265 = vdwg.mxu0
    %v266 = vmax.f32 %v154, 0.0
    %v267 = vmax.f32 %v219, 0.0
    %v268 = vmax.f32 %v157, 0.0
    %v269 = vmax.f32 %v222, 0.0
    %v270 = vmax.f32 %v160, 0.0
    %v271 = vmax.f32 %v225, 0.0
    %v272 = vmax.f32 %v163, 0.0
    %v273 = vmax.f32 %v228, 0.0
    %v274 = vmax.f32 %v166, 0.0
    %v275 = vmax.f32 %v231, 0.0
    %v276 = vmax.f32 %v169, 0.0
    %v277 = vmax.f32 %v234, 0.0
    %v278 = vmax.f32 %v172, 0.0
    %v279 = vmax.f32 %v237, 0.0
    %v280 = vmax.f32 %v175, 0.0
    %v281 = vmax.f32 %v240, 0.0
    %v282 = vmax.f32 %v178, 0.0
    %v283 = vmax.f32 %v243, 0.0
    %v284 = vmax.f32 %v181, 0.0
    %v285 = vmax.f32 %v246, 0.0
    %v286 = vmax.f32 %v184, 0.0
    %v287 = vmax.f32 %v249, 0.0
    %v288 = vmax.f32 %v187, 0.0
    %v289 = vmax.f32 %v252, 0.0
    %v290 = vmax.f32 %v190, 0.0
    %v291 = vmax.f32 %v255, 0.0
    %v292 = vmax.f32 %v193, 0.0
    %v293 = vmax.f32 %v258, 0.0
    %v294 = vmax.f32 %v196, 0.0
    %v295 = vmax.f32 %v261, 0.0
    %v296 = vmax.f32 %v199, 0.0
    %v297 = vmax.f32 %v264, 0.0
    %v298 = vld [vmem:[#allocation8] sm:$0xff]
    %v299 = vld [vmem:[#allocation8 + $0x8] sm:$0xff]
    %v300 = vld [vmem:[#allocation8 + $0x10] sm:$0xff]
    %v301 = vld [vmem:[#allocation8 + $0x18] sm:$0xff]
    %v302 = vld [vmem:[#allocation8 + $0x20] sm:$0xff]
    %v303 = vld [vmem:[#allocation8 + $0x28] sm:$0xff]
    %v304 = vld [vmem:[#allocation8 + $0x30] sm:$0xff]
    %v305 = vld [vmem:[#allocation8 + $0x38] sm:$0xff]
    %v306 = vld [vmem:[#allocation8 + $0x40] sm:$0xff]
    %v307 = vld [vmem:[#allocation8 + $0x48] sm:$0xff]
    %v308 = vld [vmem:[#allocation8 + $0x50] sm:$0xff]
    %v309 = vld [vmem:[#allocation8 + $0x58] sm:$0xff]
    %v310 = vld [vmem:[#allocation8 + $0x60] sm:$0xff]
    %v311 = vld [vmem:[#allocation8 + $0x68] sm:$0xff]
    %v312 = vld [vmem:[#allocation8 + $0x70] sm:$0xff]
    %v313 = vld [vmem:[#allocation8 + $0x78] sm:$0xff]
    %v314 = vld [vmem:[#allocation8 + $0x80] sm:$0xff]
    %v315 = vld [vmem:[#allocation8 + $0x88] sm:$0xff]
    %v316 = vld [vmem:[#allocation8 + $0x90] sm:$0xff]
    %v317 = vld [vmem:[#allocation8 + $0x98] sm:$0xff]
    %v318 = vld [vmem:[#allocation8 + $0xa0] sm:$0xff]
    %v319 = vld [vmem:[#allocation8 + $0xa8] sm:$0xff]
    %v320 = vld [vmem:[#allocation8 + $0xb0] sm:$0xff]
    %v321 = vld [vmem:[#allocation8 + $0xb8] sm:$0xff]
    %v322 = vld [vmem:[#allocation8 + $0xc0] sm:$0xff]
    %v323 = vld [vmem:[#allocation8 + $0xc8] sm:$0xff]
    %v324 = vld [vmem:[#allocation8 + $0xd0] sm:$0xff]
    %v325 = vld [vmem:[#allocation8 + $0xd8] sm:$0xff]
    %v326 = vld [vmem:[#allocation8 + $0xe0] sm:$0xff]
    %v327 = vld [vmem:[#allocation8 + $0xe8] sm:$0xff]
    %v328 = vld [vmem:[#allocation8 + $0xf0] sm:$0xff]
    %v329 = vld [vmem:[#allocation8 + $0xf8] sm:$0xff]
    %v330 = vld [vmem:[%s4] sm:$0x1]
    %v332 = vperm.slane %v330, 0
    %334 = vmatpush.msra.mxu0 %v313
    %335 = vmatpush.msra.mxu0 %v312
    %336 = vmatpush.msra.mxu0 %v311
    %337 = vmatpush.msra.mxu0 %v310
    %338 = vmatpush.msra.mxu0 %v309
    %339 = vmatpush.msra.mxu0 %v308
    %340 = vmatpush.msra.mxu0 %v307
    %341 = vmatpush.msra.mxu0 %v306
    %342 = vmatpush.msra.mxu0 %v305
    %343 = vmatpush.msra.mxu0 %v304
    %344 = vmatpush.msra.mxu0 %v303
    %345 = vmatpush.msra.mxu0 %v302
    %346 = vmatpush.msra.mxu0 %v301
    %347 = vmatpush.msra.mxu0 %v300
    %348 = vmatpush.msra.mxu0 %v299
    %349 = vmatpush.msra.mxu0 %v298
    %350 = vmatmul.f32.gmra.mxu0 %v266
    %v351 = vpop.f32.mrf.mxu0
    %v352 = vadd.f32 %v332, %v351
    %353 = vmatmul.f32.gmra.mxu0 %v268
    %v354 = vpop.f32.mrf.mxu0
    %v355 = vadd.f32 %v332, %v354
    %356 = vmatmul.f32.gmra.mxu0 %v270
    %v357 = vpop.f32.mrf.mxu0
    %v358 = vadd.f32 %v332, %v357
    %359 = vmatmul.f32.gmra.mxu0 %v272
    %v360 = vpop.f32.mrf.mxu0
    %v361 = vadd.f32 %v332, %v360
    %362 = vmatmul.f32.gmra.mxu0 %v274
    %v363 = vpop.f32.mrf.mxu0
    %v364 = vadd.f32 %v332, %v363
    %365 = vmatmul.f32.gmra.mxu0 %v276
    %v366 = vpop.f32.mrf.mxu0
    %v367 = vadd.f32 %v332, %v366
    %368 = vmatmul.f32.gmra.mxu0 %v278
    %v369 = vpop.f32.mrf.mxu0
    %v370 = vadd.f32 %v332, %v369
    %371 = vmatmul.f32.gmra.mxu0 %v280
    %v372 = vpop.f32.mrf.mxu0
    %v373 = vadd.f32 %v332, %v372
    %374 = vmatmul.f32.gmra.mxu0 %v282
    %v375 = vpop.f32.mrf.mxu0
    %v376 = vadd.f32 %v332, %v375
    %377 = vmatmul.f32.gmra.mxu0 %v284
    %v378 = vpop.f32.mrf.mxu0
    %v379 = vadd.f32 %v332, %v378
    %380 = vmatmul.f32.gmra.mxu0 %v286
    %v381 = vpop.f32.mrf.mxu0
    %v382 = vadd.f32 %v332, %v381
    %383 = vmatmul.f32.gmra.mxu0 %v288
    %v384 = vpop.f32.mrf.mxu0
    %v385 = vadd.f32 %v332, %v384
    %386 = vmatmul.f32.gmra.mxu0 %v290
    %v387 = vpop.f32.mrf.mxu0
    %v388 = vadd.f32 %v332, %v387
    %389 = vmatmul.f32.gmra.mxu0 %v292
    %v390 = vpop.f32.mrf.mxu0
    %v391 = vadd.f32 %v332, %v390
    %392 = vmatmul.f32.gmra.mxu0 %v294
    %v393 = vpop.f32.mrf.mxu0
    %v394 = vadd.f32 %v332, %v393
    %395 = vmatmul.f32.gmra.mxu0 %v296
    %v396 = vpop.f32.mrf.mxu0
    %v397 = vadd.f32 %v332, %v396
    %398 = vdwg.mxu0
    %399 = vmatpush.msra.mxu0 %v329
    %400 = vmatpush.msra.mxu0 %v328
    %401 = vmatpush.msra.mxu0 %v327
    %402 = vmatpush.msra.mxu0 %v326
    %403 = vmatpush.msra.mxu0 %v325
    %404 = vmatpush.msra.mxu0 %v324
    %405 = vmatpush.msra.mxu0 %v323
    %406 = vmatpush.msra.mxu0 %v322
    %407 = vmatpush.msra.mxu0 %v321
    %408 = vmatpush.msra.mxu0 %v320
    %409 = vmatpush.msra.mxu0 %v319
    %410 = vmatpush.msra.mxu0 %v318
    %411 = vmatpush.msra.mxu0 %v317
    %412 = vmatpush.msra.mxu0 %v316
    %413 = vmatpush.msra.mxu0 %v315
    %414 = vmatpush.msra.mxu0 %v314
    %415 = vmatmul.f32.gmra.mxu0 %v267
    %v416 = vpop.f32.mrf.mxu0
    %v417 = vadd.f32 %v352, %v416
    %418 = vmatmul.f32.gmra.mxu0 %v269
    %v419 = vpop.f32.mrf.mxu0
    %v420 = vadd.f32 %v355, %v419
    %421 = vmatmul.f32.gmra.mxu0 %v271
    %v422 = vpop.f32.mrf.mxu0
    %v423 = vadd.f32 %v358, %v422
    %424 = vmatmul.f32.gmra.mxu0 %v273
    %v425 = vpop.f32.mrf.mxu0
    %v426 = vadd.f32 %v361, %v425
    %427 = vmatmul.f32.gmra.mxu0 %v275
    %v428 = vpop.f32.mrf.mxu0
    %v429 = vadd.f32 %v364, %v428
    %430 = vmatmul.f32.gmra.mxu0 %v277
    %v431 = vpop.f32.mrf.mxu0
    %v432 = vadd.f32 %v367, %v431
    %433 = vmatmul.f32.gmra.mxu0 %v279
    %v434 = vpop.f32.mrf.mxu0
    %v435 = vadd.f32 %v370, %v434
    %436 = vmatmul.f32.gmra.mxu0 %v281
    %v437 = vpop.f32.mrf.mxu0
    %v438 = vadd.f32 %v373, %v437
    %439 = vmatmul.f32.gmra.mxu0 %v283
    %v440 = vpop.f32.mrf.mxu0
    %v441 = vadd.f32 %v376, %v440
    %442 = vmatmul.f32.gmra.mxu0 %v285
    %v443 = vpop.f32.mrf.mxu0
    %v444 = vadd.f32 %v379, %v443
    %445 = vmatmul.f32.gmra.mxu0 %v287
    %v446 = vpop.f32.mrf.mxu0
    %v447 = vadd.f32 %v382, %v446
    %448 = vmatmul.f32.gmra.mxu0 %v289
    %v449 = vpop.f32.mrf.mxu0
    %v450 = vadd.f32 %v385, %v449
    %451 = vmatmul.f32.gmra.mxu0 %v291
    %v452 = vpop.f32.mrf.mxu0
    %v453 = vadd.f32 %v388, %v452
    %454 = vmatmul.f32.gmra.mxu0 %v293
    %v455 = vpop.f32.mrf.mxu0
    %v456 = vadd.f32 %v391, %v455
    %457 = vmatmul.f32.gmra.mxu0 %v295
    %v458 = vpop.f32.mrf.mxu0
    %v459 = vadd.f32 %v394, %v458
    %460 = vmatmul.f32.gmra.mxu0 %v297
    %v461 = vpop.f32.mrf.mxu0
    %v462 = vadd.f32 %v397, %v461
    %463 = vdwg.mxu0
    %464 = vst [vmem:[#allocation10] sm:$0xff] %v417
    %465 = vst [vmem:[#allocation10 + $0x8] sm:$0xff] %v420
    %466 = vst [vmem:[#allocation10 + $0x10] sm:$0xff] %v423
    %467 = vst [vmem:[#allocation10 + $0x18] sm:$0xff] %v426
    %468 = vst [vmem:[#allocation10 + $0x20] sm:$0xff] %v429
    %469 = vst [vmem:[#allocation10 + $0x28] sm:$0xff] %v432
    %470 = vst [vmem:[#allocation10 + $0x30] sm:$0xff] %v435
    %471 = vst [vmem:[#allocation10 + $0x38] sm:$0xff] %v438
    %472 = vst [vmem:[#allocation10 + $0x40] sm:$0xff] %v441
    %473 = vst [vmem:[#allocation10 + $0x48] sm:$0xff] %v444
    %474 = vst [vmem:[#allocation10 + $0x50] sm:$0xff] %v447
    %475 = vst [vmem:[#allocation10 + $0x58] sm:$0xff] %v450
    %476 = vst [vmem:[#allocation10 + $0x60] sm:$0xff] %v453
    %477 = vst [vmem:[#allocation10 + $0x68] sm:$0xff] %v456
    %478 = vst [vmem:[#allocation10 + $0x70] sm:$0xff] %v459
    %479 = vst [vmem:[#allocation10 + $0x78] sm:$0xff] %v462
    // Predicated region
    $region38: #{tpu_custom_call.1} parent=1 // pred_check
      _
    $region39: #{tpu_custom_call.1} parent=1 // pred_check_branch
      %481 = sbr.rel (0) target = $region41
    $region40: #{tpu_custom_call.1} parent=1 // pred_region
      %483 = vsyncadd [#allocation4], 0
      %s484 = sshll.u32 [#allocation10], 4
      %s485 = int_to_ptr.vmem [resolvable:$true] %s484
      %s486 = sshll.u32 %s5, 4
      %s487 = int_to_ptr.hbm [resolvable:$true] %s486
      %492 = dma.vmem_to_hbm [thread:$0]  %s485, 2048, %s487, [#allocation4], 128, 128, 8
    $region41: #{tpu_custom_call.1} parent=1 // pred_fallthru
      _
    // Predicated region
    $region42: #{tpu_custom_call.1} parent=1 // pred_check
      _
    $region43: #{tpu_custom_call.1} parent=1 // pred_check_branch
      %494 = sbr.rel (0) target = $region45
    $region44: #{tpu_custom_call.1} parent=1 // pred_region
      %496 = dma.done [#allocation4], 2048
    $region45: #{tpu_custom_call.1} parent=1 // pred_fallthru
      _
    %497 = vsyncpa [#allocation3], 1
    %498 = vsyncpa [#allocation6], 1
    %499 = vsyncpa [#allocation9], 1
    %500 = vsyncpa [#allocation4], 1

</llo_original>
